<compile_context>
chip_gen: v7x
topology: tpu7x:2x2x1
jax: 0.10.0
libtpu: 0.0.40
codegen_flags: <defaults>
</compile_context>

<pallas_src>
import functools

import jax
import jax.numpy as jnp
from jax.experimental import pallas as pl
from jax.experimental.pallas import tpu as pltpu


# ----------------------------------------------------------------------------- kernel
def _reinforce_kernel(adv_ref, logits_ref, rloss_ref, acc_ref, *, inv_k, n_chunks):
    # Keep all program_id / num_programs calls at the kernel top level (never inside a
    # pl.when body); the pl.when bodies only close over the resulting traced scalars.
    k = pl.program_id(1)
    last_k = pl.num_programs(1) - 1

    # ---- prologue for each B tile: reset the lane-wise accumulator ---------------
    @pl.when(k == 0)
    def _init():
        acc_ref[...] = jnp.zeros_like(acc_ref)

    # ---- steady state: pure VPU lane-wise partial sums (no XLU, no masked stores) -
    # Column chunks are 128-lane aligned slices of the tile -> clean vreg loads; the
    # bf16 -> f32 cast happens per chunk in vregs, so HBM traffic stays narrow.
    for c in range(n_chunks):
        col = logits_ref[:, c * 128:(c + 1) * 128].astype(jnp.float32)   # (TB, 128)
        acc_ref[...] += col

    # ---- epilogue on the last K step: one cross-lane reduce + the advantage mul ---
    @pl.when(k == last_k)
    def _fini():
        row_sum = jnp.sum(acc_ref[...], axis=1, keepdims=True)           # (TB, 1)
        rloss_ref[...] = adv_ref[...] * (row_sum * inv_k)


# ------------------------------------------------------------------------ tile picking
def _pick_divisor_tile(dim, target, align):
    """Largest multiple of `align` <= `target` that evenly divides `dim`; else `dim`."""
    if dim <= target:
        return dim
    t = (target // align) * align
    while t >= align:
        if dim % t == 0:
            return t
        t -= align
    return dim


def _pick_tiles(B, Kp, itemsize, block_b, block_k):
    # Align TB to the dtype's sublane packing (bf16 packs 16 rows per vreg, int8/fp8 32).
    align_b = {1: 32, 2: 16}.get(itemsize, 8)

    if block_b is not None:
        TB = block_b
    else:
        target_b = 256
        if B >= 2 * align_b:
            # Keep the "parallel" axis >= 2 steps so both v7x TensorCores get work.
            target_b = min(target_b, max(((B // 2) // align_b) * align_b, align_b))
        TB = _pick_divisor_tile(B, target_b, align_b)

    if block_k is not None:
        TK = block_k
    else:
        budget = 8 * 1024 * 1024                       # bytes per logits tile, native dtype
        target_k = (budget // (TB * itemsize)) // 128 * 128
        target_k = max(128, min(8192, target_k))
        TK = _pick_divisor_tile(Kp, target_k, 128)
    return TB, TK


# ------------------------------------------------------------------------- pallas call
def _reinforce_pallas(adv2d, logits2d, k_true, block_b, block_k):
    B, _ = adv2d.shape
    _, Kp = logits2d.shape

    TB, TK = _pick_tiles(B, Kp, logits2d.dtype.itemsize, block_b, block_k)
    assert B % TB == 0, (B, TB)
    assert Kp % TK == 0 and TK % 128 == 0, (Kp, TK)
    assert TB % 8 == 0 or TB == B, (TB, B)
    grid = (B // TB, Kp // TK)

    kernel = functools.partial(
        _reinforce_kernel, inv_k=1.0 / float(k_true), n_chunks=TK // 128)

    # TODO(synk): on v7x, sweep pipeline_mode=pl.Buffered(3) on the logits BlockSpec.
    return pl.pallas_call(
        kernel,
        out_shape=jax.ShapeDtypeStruct((B, 1), jnp.float32),
        grid_spec=pltpu.PrefetchScalarGridSpec(
            num_scalar_prefetch=0,
            grid=grid,
            in_specs=[
                pl.BlockSpec((TB, 1), lambda i, k: (i, 0)),    # advantage (loss - baseline)
                pl.BlockSpec((TB, TK), lambda i, k: (i, k)),   # logits tile, native dtype
            ],
            out_specs=pl.BlockSpec((TB, 1), lambda i, k: (i, 0)),
            scratch_shapes=[pltpu.VMEM((TB, 128), jnp.float32)],   # lane-wise row sums
        ),
        compiler_params=pltpu.CompilerParams(
            dimension_semantics=("parallel", "arbitrary"),
            vmem_limit_bytes=48 * 1024 * 1024,
        ),
    )(adv2d, logits2d)


# ---------------------------------------------------------------------------- wrapper
@functools.partial(jax.jit, static_argnames=("alpha", "block_b", "block_k"))
def _reinforce_forward(loss, logits, baseline, is_first, alpha, block_b, block_k):
    B = loss.shape[0]
    loss1d = jnp.reshape(loss, (B,)).astype(jnp.float32)
    loss_mean = jnp.mean(loss1d)

    # Scalar baseline math hoisted out of the kernel (fused by XLA in the same dispatch).
    b = jnp.where(is_first[0] == 1, loss_mean, baseline[0])
    new_b = alpha * b + (1.0 - alpha) * loss_mean

    adv2d = (loss1d - b)[:, None]                         # (B, 1) detached advantage

    logits2d = jnp.reshape(logits, (B, -1))               # keep native dtype over the wire
    K = logits2d.shape[1]
    Kp = ((K + 127) // 128) * 128
    if Kp != K:
        # zero-pad K to a lane multiple: zeros do not change the row sums; mean uses 1/K.
        logits2d = jnp.pad(logits2d, ((0, 0), (0, Kp - K)))

    rloss2d = _reinforce_pallas(adv2d, logits2d, K, block_b, block_k)
    return rloss2d[:, 0], jnp.reshape(new_b, (1,))


class Reinforce:
    """JAX/Pallas port of the stateful PyTorch Reinforce module (forward only)."""

    # TODO(synk): add a custom_vjp enforcing the detached-advantage gradient
    # (grad only through logits) if this loss is ever differentiated.

    def __init__(self, alpha=0.9, block_b=None, block_k=None):
        self.alpha = float(alpha)
        self.block_b = block_b
        self.block_k = block_k
        self.baseline = None   # jnp array of shape (1,) once initialized

    def __call__(self, loss, logits):
        if self.baseline is None:
            baseline = jnp.zeros((1,), jnp.float32)
            is_first = jnp.ones((1,), jnp.int32)
        else:
            baseline = self.baseline
            is_first = jnp.zeros((1,), jnp.int32)
        rloss, new_b = _reinforce_forward(loss, logits, baseline, is_first,
                                          self.alpha, self.block_b, self.block_k)
        self.baseline = new_b
        return rloss


# -------------------------------------------------------------------------- reference
def _reference(loss, logits, baseline, alpha):
    """Pure-JAX reference mirroring the PyTorch semantics."""
    B = loss.shape[0]
    loss = jnp.reshape(loss, (B,)).astype(jnp.float32)
    logits = jnp.reshape(logits, (B, -1)).astype(jnp.float32)
    if baseline is None:
        b = jnp.mean(loss)
    else:
        b = jnp.reshape(baseline, ())
    rloss = ((loss[:, None] - b) * logits).mean(1)
    new_b = alpha * b + (1 - alpha) * jnp.mean(loss)
    return rloss, jnp.reshape(new_b, (1,))


if __name__ == "__main__":
    key = jax.random.PRNGKey(0)
    k1, k2, k3, k4, k5 = jax.random.split(key, 5)

    # --- main test: bf16 logits, explicit small blocks so the grid is exercised -----
    B, K = 32, 512
    loss = jax.random.uniform(k1, (B,), jnp.float32)                     # per-sample loss
    logits = jax.random.normal(k2, (B, K), jnp.float32).astype(jnp.bfloat16)
    loss2 = jax.random.uniform(k3, (B,), jnp.float32)                    # second step

    # grid = (32//16, 512//128) = (2 parallel, 4 arbitrary); TB=16 is bf16 sublane aligned.
    mod = Reinforce(alpha=0.9, block_b=16, block_k=128)

    # First call: baseline is initialized to loss.mean().
    out1 = mod(loss, logits)
    jax.block_until_ready(out1)
    ref1, ref_b1 = _reference(loss, logits, None, 0.9)
    assert out1.shape == (B,)
    assert jnp.allclose(out1, ref1, atol=1e-5, rtol=1e-5), (out1, ref1)
    assert jnp.allclose(mod.baseline, ref_b1, atol=1e-5, rtol=1e-5), (mod.baseline, ref_b1)

    # Second call: uses the EMA baseline state.
    out2 = mod(loss2, logits)
    jax.block_until_ready(out2)
    ref2, ref_b2 = _reference(loss2, logits, ref_b1, 0.9)
    assert jnp.allclose(out2, ref2, atol=1e-5, rtol=1e-5), (out2, ref2)
    assert jnp.allclose(mod.baseline, ref_b2, atol=1e-5, rtol=1e-5), (mod.baseline, ref_b2)

    # --- secondary test: default tiling + K-padding path (K not a multiple of 128) --
    B2, K2 = 8, 200
    loss3 = jax.random.uniform(k4, (B2,), jnp.float32)
    logits3 = jax.random.normal(k5, (B2, K2), jnp.float32)
    mod2 = Reinforce(alpha=0.5)
    out3 = mod2(loss3, logits3)
    jax.block_until_ready(out3)
    ref3, ref_b3 = _reference(loss3, logits3, None, 0.5)
    assert out3.shape == (B2,)
    assert jnp.allclose(out3, ref3, atol=1e-5, rtol=1e-5), (out3, ref3)
    assert jnp.allclose(mod2.baseline, ref_b3, atol=1e-5, rtol=1e-5), (mod2.baseline, ref_b3)

    print("KERNEL_OK")
</pallas_src>

<mosaic_0001>
module attributes {stable_mosaic.version = 11 : i64} {
  func.func @_reinforce_kernel(%arg0: i32, %arg1: i32, %arg2: memref<16x1xf32, #tpu.memory_space<vmem>>, %arg3: memref<16x128xbf16, #tpu.memory_space<vmem>>, %arg4: memref<16x1xf32, #tpu.memory_space<vmem>>, %arg5: memref<16x128xf32, #tpu.memory_space<vmem>>) attributes {dimension_semantics = [#tpu.dimension_semantics<parallel>, #tpu.dimension_semantics<arbitrary>], iteration_bounds = array<i64: 2, 4>, scalar_prefetch = 0 : i64, scratch_operands = 1 : i64, tpu.core_type = #tpu.core_type<tc>, window_params = [{transform_indices = @transform_0, window_bounds = array<i64: 16, 1>}, {transform_indices = @transform_1, window_bounds = array<i64: 16, 128>}, {transform_indices = @transform_2, window_bounds = array<i64: 16, 1>}]} {
    %c0_i32 = arith.constant 0 : i32
    %0 = arith.cmpi eq, %arg1, %c0_i32 : i32
    %1 = arith.extui %0 : i1 to i32
    %c0_i32_0 = arith.constant 0 : i32
    %2 = arith.cmpi ne, %1, %c0_i32_0 : i32
    scf.if %2 {
      %cst = arith.constant 0.000000e+00 : f32
      %11 = vector.broadcast %cst : f32 to vector<16x128xf32>
      %c0_7 = arith.constant 0 : index
      %c0_8 = arith.constant 0 : index
      %12 = vector.load %arg5[%c0_7, %c0_8] : memref<16x128xf32, #tpu.memory_space<vmem>>, vector<16x128xf32>
      tpu.vector_store %arg5[%c0_7, %c0_8], %11 {strides = array<i32>} : memref<16x128xf32, #tpu.memory_space<vmem>>, vector<16x128xf32>,
    } else {
    }
    %c0 = arith.constant 0 : index
    %c0_1 = arith.constant 0 : index
    %3 = vector.load %arg3[%c0, %c0_1] : memref<16x128xbf16, #tpu.memory_space<vmem>>, vector<16x128xbf16>
    %4 = arith.extf %3 : vector<16x128xbf16> to vector<16x128xf32>
    %c0_2 = arith.constant 0 : index
    %c0_3 = arith.constant 0 : index
    %5 = vector.load %arg5[%c0_2, %c0_3] : memref<16x128xf32, #tpu.memory_space<vmem>>, vector<16x128xf32>
    %6 = arith.addf %5, %4 : vector<16x128xf32>
    %c0_4 = arith.constant 0 : index
    %c0_5 = arith.constant 0 : index
    %7 = vector.load %arg5[%c0_4, %c0_5] : memref<16x128xf32, #tpu.memory_space<vmem>>, vector<16x128xf32>
    tpu.vector_store %arg5[%c0_4, %c0_5], %6 {strides = array<i32>} : memref<16x128xf32, #tpu.memory_space<vmem>>, vector<16x128xf32>,
    %c3_i32 = arith.constant 3 : i32
    %8 = arith.cmpi eq, %arg1, %c3_i32 : i32
    %9 = arith.extui %8 : i1 to i32
    %c0_i32_6 = arith.constant 0 : i32
    %10 = arith.cmpi ne, %9, %c0_i32_6 : i32
    scf.if %10 {
      %c0_7 = arith.constant 0 : index
      %c0_8 = arith.constant 0 : index
      %11 = vector.load %arg5[%c0_7, %c0_8] : memref<16x128xf32, #tpu.memory_space<vmem>>, vector<16x128xf32>
      %cst = arith.constant dense<0.000000e+00> : vector<16xf32>
      %12 = vector.multi_reduction <add>, %11, %cst [1] : vector<16x128xf32> to vector<16xf32>
      %13 = vector.shape_cast %12 : vector<16xf32> to vector<16x1xf32>
      %c0_9 = arith.constant 0 : index
      %c0_10 = arith.constant 0 : index
      %14 = vector.load %arg2[%c0_9, %c0_10] : memref<16x1xf32, #tpu.memory_space<vmem>>, vector<16x1xf32>
      %cst_11 = arith.constant 0.001953125 : f32
      %15 = vector.broadcast %cst_11 : f32 to vector<16x1xf32>
      %16 = arith.mulf %13, %15 : vector<16x1xf32>
      %17 = arith.mulf %14, %16 : vector<16x1xf32>
      %c0_12 = arith.constant 0 : index
      %c0_13 = arith.constant 0 : index
      %18 = vector.load %arg4[%c0_12, %c0_13] : memref<16x1xf32, #tpu.memory_space<vmem>>, vector<16x1xf32>
      tpu.vector_store %arg4[%c0_12, %c0_13], %17 {strides = array<i32>} : memref<16x1xf32, #tpu.memory_space<vmem>>, vector<16x1xf32>,
    } else {
    }
    return
  }
  func.func @transform_0(%arg0: i32, %arg1: i32) -> (i32, i32) {
    %c0_i32 = arith.constant 0 : i32
    %c0_i32_0 = arith.constant 0 : i32
    return %arg0, %c0_i32 : i32, i32
  }
  func.func @transform_1(%arg0: i32, %arg1: i32) -> (i32, i32) {
    %c0_i32 = arith.constant 0 : i32
    return %arg0, %arg1 : i32, i32
  }
  func.func @transform_2(%arg0: i32, %arg1: i32) -> (i32, i32) {
    %c0_i32 = arith.constant 0 : i32
    %c0_i32_0 = arith.constant 0 : i32
    return %arg0, %c0_i32 : i32, i32
  }
}

</mosaic_0001>

<llo_original>
// kernel: _reinforce_forward.1
$region0: #{_reinforce_forward.1}
  #allocation0 [shape = 'u32[]', space=smem, size = 0x4, offset = 0x4, fixed_abs, tag = 'smem constant byte address 0x4 - core index']
  #allocation1 [shape = 'u32[144,128]{1,0:T(1,128)}', space=vmem, size = 0x12000, scoped, tag = 'internal scratch']
  #allocation2 [shape = 'f32[16,128]{1,0:T(8,128)}', space=vmem, size = 0x2000, scoped, tag = 'scratch operand']
  %s0 = inlined_call_operand.vmem [shape: f32[32,1], index: 0, kind: input, shape index: {}]
  %s1 = inlined_call_operand.vmem [shape: bf16[32,512], index: 1, kind: input, shape index: {}]
  %s2 = inlined_call_operand.vmem [shape: f32[32,1], index: 2, kind: output, shape index: {}]
  %s3 = sld [smem:[#allocation0]]
  $region90: #{_reinforce_forward.1} parent=0
    _
  %s5 = ssub.s32 1, %s3
  %s6 = scalar_select 0, %s5, %s3
  $region1: #{_reinforce_forward.1} parent=0
    #allocation3 [shape = 'u8[8192]{0}', space=vmem, size = 0x2000, scoped, tag = 'input window, operand 1']
    loop: start=0, step=1, limit=10
    $region2: #{_reinforce_forward.1} parent=1 // loop_pre_header
      _
    $region3: #{_reinforce_forward.1} parent=1 // loop_header
      %s8 = sphi 0, %s12
      %p9 = scmp.ge.s32.totalorder %s8, 10
      %s15 = sphi 0, %s27
      %s16 = sphi 0, %s23
      %s17 = sphi 0, %s15
      %s18 = sphi 0, %s16
      %s19 = sphi 0, %s17
      %s20 = sphi 0, %s18
      %s30 = sphi 0, %s32
      %s33 = sphi 0, %s30
      %s34 = sphi 0, %s33
      %s50 = sphi 0, %s34
      %s58 = sphi 0, %s60
      %s61 = sphi 0, %s58
      %s62 = sphi 0, %s61
      %s78 = sphi 0, %s62
      %s84 = sphi 0, %s86
      %s87 = sphi 0, %s84
      %s88 = sphi 0, %s87
      %s104 = sphi 0, %s88
    $region4: #{_reinforce_forward.1} parent=1 // loop_header_branch
      %11 = sbr.rel (%p9) target = $region8
    $region5: #{_reinforce_forward.1} parent=1 // loop_body
      %s13 = ssub.s32 %s8, 1
      %s14 = ssub.s32 %s8, 2
      %s21 = sadd.s32 1, %s16
      %p22 = scmp.ge.s32.totalorder %s21, 4
      %s23 = scalar_select %p22, 0, %s21
      %s24 = sadd.s32 1, %s15
      %s25 = scalar_select %p22, %s24, %s15
      %p26 = scmp.ge.s32.totalorder %s25, 2
      %s27 = scalar_select %p26, 0, %s25
      %s28 = ssub.s32 %s15, %s27
      %p29 = scmp.eq.s32.totalorder %s28, 0
      %s31 = sadd.s32 %s30, 1
      %s32 = scalar_select %p29, %s30, %s31
      %p35 = pneg %p29
      %p36 = scmp.eq.s32.totalorder %s8, 7
      %p37 = por %p35, %p36
      %p38 = scmp.ne.s32.totalorder %s30, %s33
      %p39 = scmp.eq.s32.totalorder %s8, 0
      %p40 = por %p38, %p39
      %p41 = scmp.ne.s32.totalorder %s30, %s33
      %p42 = scmp.eq.s32.totalorder %s13, 7
      %p43 = por %p41, %p42
      %p44 = scmp.ne.s32.totalorder %s33, %s34
      %p45 = scmp.eq.s32.totalorder %s13, 0
      %p46 = por %p44, %p45
      %p47 = scmp.ne.s32.totalorder %s33, %s34
      %p48 = scmp.eq.s32.totalorder %s14, 7
      %p49 = por %p47, %p48
      %p51 = scmp.ne.s32.totalorder %s34, %s50
      %p52 = scmp.eq.s32.totalorder %s14, 0
      %p53 = por %p51, %p52
      %s54 = ssub.s32 %s15, %s27
      %s55 = ssub.s32 %s16, %s23
      %s56 = sor.u32 %s54, %s55
      %p57 = scmp.eq.s32.totalorder %s56, 0
      %s59 = sadd.s32 %s58, 1
      %s60 = scalar_select %p57, %s58, %s59
      %p63 = pneg %p57
      %p64 = scmp.eq.s32.totalorder %s8, 7
      %p65 = por %p63, %p64
      %p66 = scmp.ne.s32.totalorder %s58, %s61
      %p67 = scmp.eq.s32.totalorder %s8, 0
      %p68 = por %p66, %p67
      %p69 = scmp.ne.s32.totalorder %s58, %s61
      %p70 = scmp.eq.s32.totalorder %s13, 7
      %p71 = por %p69, %p70
      %p72 = scmp.ne.s32.totalorder %s61, %s62
      %p73 = scmp.eq.s32.totalorder %s13, 0
      %p74 = por %p72, %p73
      %p75 = scmp.ne.s32.totalorder %s61, %s62
      %p76 = scmp.eq.s32.totalorder %s14, 7
      %p77 = por %p75, %p76
      %p79 = scmp.ne.s32.totalorder %s62, %s78
      %p80 = scmp.eq.s32.totalorder %s14, 0
      %p81 = por %p79, %p80
      %s82 = ssub.s32 %s15, %s27
      %p83 = scmp.eq.s32.totalorder %s82, 0
      %s85 = sadd.s32 %s84, 1
      %s86 = scalar_select %p83, %s84, %s85
      %p89 = pneg %p83
      %p90 = scmp.eq.s32.totalorder %s8, 7
      %p91 = por %p89, %p90
      %p92 = scmp.ne.s32.totalorder %s84, %s87
      %p93 = scmp.eq.s32.totalorder %s8, 0
      %p94 = por %p92, %p93
      %p95 = scmp.ne.s32.totalorder %s84, %s87
      %p96 = scmp.eq.s32.totalorder %s13, 7
      %p97 = por %p95, %p96
      %p98 = scmp.ne.s32.totalorder %s87, %s88
      %p99 = scmp.eq.s32.totalorder %s13, 0
      %p100 = por %p98, %p99
      %p101 = scmp.ne.s32.totalorder %s87, %s88
      %p102 = scmp.eq.s32.totalorder %s14, 7
      %p103 = por %p101, %p102
      %p105 = scmp.ne.s32.totalorder %s88, %s104
      %p106 = scmp.eq.s32.totalorder %s14, 0
      %p107 = por %p105, %p106
      %p108 = scmp.le.s32.totalorder 1, %s8
      %p109 = scmp.lt.s32.totalorder %s8, 9
      %p110 = pnand %p108, %p109
      %p111 = pneg %p110
      // Predicated region
      $region9: #{_reinforce_forward.1} parent=5 // pred_check
        _
      $region10: #{_reinforce_forward.1} parent=5 // pred_check_branch
        %113 = sbr.rel (%p110) target = $region12
      $region11: #{_reinforce_forward.1} parent=5 // pred_region
        %s114 = ssub.s32 %s8, 1
      $region12: #{_reinforce_forward.1} parent=5 // pred_fallthru
        _
      %p115 = scmp.lt.s32.totalorder %s8, 8
      // Predicated region
      $region13: #{_reinforce_forward.1} parent=5 // pred_check
        %p116 = pneg %p115
      $region14: #{_reinforce_forward.1} parent=5 // pred_check_branch
        %118 = sbr.rel (%p116) target = $region16
      $region15: #{_reinforce_forward.1} parent=5 // pred_region
        // Predicated region
        $region17: #{_reinforce_forward.1} parent=15 // pred_check
          %p119 = pneg %p40
        $region18: #{_reinforce_forward.1} parent=15 // pred_check_branch
          %121 = sbr.rel (%p119) target = $region20
        $region19: #{_reinforce_forward.1} parent=15 // pred_region
          %s122 = smul.u32 2, %s15
          %p123 = scmp.lt.s32.totalorder %s122, 3
          %s124 = scalar_select %p123, %s122, 3
          %s125 = smul.addr %s124, 8
          %s126 = scalar_lea.vmem %s0, %s125
          %s127 = smul.u32 2, %s15
        $region20: #{_reinforce_forward.1} parent=15 // pred_fallthru
          _
        // Predicated region
        $region21: #{_reinforce_forward.1} parent=15 // pred_check
          %p128 = pneg %p68
        $region22: #{_reinforce_forward.1} parent=15 // pred_check_branch
          %130 = sbr.rel (%p128) target = $region24
        $region23: #{_reinforce_forward.1} parent=15 // pred_region
          %s131 = sand.u32 %s58, 1
          %s132 = sand.u32 %s58, 1
          %s133 = smul.addr %s132, 8
          %s134 = scalar_lea.vmem [#allocation3], %s133
          %s135 = smul.u32 2, %s15
          %s136 = smul.addr %s135, 4
          %s137 = sadd.s32 %s16, %s136
          %s138 = smul.addr %s137, 4
          %s139 = scalar_lea.vmem %s1, %s138
          // Predicated region
          $region25: #{_reinforce_forward.1} parent=23 // pred_check
            _
          $region26: #{_reinforce_forward.1} parent=23 // pred_check_branch
            %141 = sbr.rel (0) target = $region28
          $region27: #{_reinforce_forward.1} parent=23 // pred_region
            // Predicated region
            $region29: #{_reinforce_forward.1} parent=27 // pred_check
              _
            $region30: #{_reinforce_forward.1} parent=27 // pred_check_branch
              %143 = sbr.rel target = $region32
            $region31: #{_reinforce_forward.1} parent=27 // pred_region
              // Predicated region
              $region44: #{_reinforce_forward.1} parent=31 // pred_check
                _
              $region45: #{_reinforce_forward.1} parent=31 // pred_check_branch
                %160 = sbr.rel (0) target = $region47
              $region46: #{_reinforce_forward.1} parent=31 // pred_region
                loop: start=0, step=1, limit=1
                $region48: #{_reinforce_forward.1} parent=46 // loop_pre_header
                  _
                $region49: #{_reinforce_forward.1} parent=46 // loop_header
                  %s162 = sphi 0, %s166
                  %p163 = scmp.ge.s32.totalorder %s162, 1
                  %s167 = sphi %s139, %s139
                  %s168 = sphi %s134, %s134
                $region50: #{_reinforce_forward.1} parent=46 // loop_header_branch
                  %165 = sbr.rel (%p163) target = $region54
                $region51: #{_reinforce_forward.1} parent=46 // loop_body
                  _
                $region52: #{_reinforce_forward.1} parent=46 // loop_footer
                  %s166 = sadd.s32 1, %s162
                $region53: #{_reinforce_forward.1} parent=46 // loop_footer_branch
                  %161 = sbr.rel target = $region49
                $region54: #{_reinforce_forward.1} parent=46 // loop_exit
                  _
                loop: start=0, step=1, limit=1
                $region55: #{_reinforce_forward.1} parent=46 // loop_pre_header
                  _
                $region56: #{_reinforce_forward.1} parent=46 // loop_header
                  %s171 = sphi 0, %s175
                  %p172 = scmp.ge.s32.totalorder %s171, 1
                  %s176 = sphi %s139, %s139
                  %s177 = sphi %s134, %s134
                $region57: #{_reinforce_forward.1} parent=46 // loop_header_branch
                  %174 = sbr.rel (%p172) target = $region61
                $region58: #{_reinforce_forward.1} parent=46 // loop_body
                  %v178 = vld [vmem:[%s176] sm:$0xf]
                  %179 = vst [vmem:[%s177] sm:$0xf] %v178
                  %v180 = vld [vmem:[%s176 + $0x10] sm:$0xf]
                  %181 = vst [vmem:[%s177 + $0x4] sm:$0xf] %v180
                $region59: #{_reinforce_forward.1} parent=46 // loop_footer
                  %s175 = sadd.s32 1, %s171
                $region60: #{_reinforce_forward.1} parent=46 // loop_footer_branch
                  %170 = sbr.rel target = $region56
                $region61: #{_reinforce_forward.1} parent=46 // loop_exit
                  _
              $region47: #{_reinforce_forward.1} parent=31 // pred_fallthru
                _
            $region32: #{_reinforce_forward.1} parent=27 // pred_fallthru
              _
            // Predicated region
            $region33: #{_reinforce_forward.1} parent=27 // pred_check
              _
            $region34: #{_reinforce_forward.1} parent=27 // pred_check_branch
              %145 = sbr.rel (0) target = $region36
            $region35: #{_reinforce_forward.1} parent=27 // pred_region
              loop: start=0, step=1, limit=1
              $region37: #{_reinforce_forward.1} parent=35 // loop_pre_header
                _
              $region38: #{_reinforce_forward.1} parent=35 // loop_header
                %s148 = sphi 0, %s152
                %p149 = scmp.ge.s32.totalorder %s148, 1
                %s153 = sphi %s139, %s139
                %s154 = sphi %s134, %s134
              $region39: #{_reinforce_forward.1} parent=35 // loop_header_branch
                %151 = sbr.rel (%p149) target = $region43
              $region40: #{_reinforce_forward.1} parent=35 // loop_body
                %v155 = vld [vmem:[%s153] sm:$0xf]
                %156 = vst [vmem:[%s154] sm:$0xf] %v155
                %v157 = vld [vmem:[%s153 + $0x10] sm:$0xf]
                %158 = vst [vmem:[%s154 + $0x4] sm:$0xf] %v157
              $region41: #{_reinforce_forward.1} parent=35 // loop_footer
                %s152 = sadd.s32 1, %s148
              $region42: #{_reinforce_forward.1} parent=35 // loop_footer_branch
                %147 = sbr.rel target = $region38
              $region43: #{_reinforce_forward.1} parent=35 // loop_exit
                _
            $region36: #{_reinforce_forward.1} parent=27 // pred_fallthru
              _
          $region28: #{_reinforce_forward.1} parent=23 // pred_fallthru
            _
          %182 = vnop
        $region24: #{_reinforce_forward.1} parent=15 // pred_fallthru
          _
      $region16: #{_reinforce_forward.1} parent=5 // pred_fallthru
        _
      %p183 = scmp.le.s32.totalorder 1, %s8
      %p184 = scmp.lt.s32.totalorder %s8, 9
      %p185 = pnand %p183, %p184
      %p186 = pneg %p185
      // Predicated region
      $region62: #{_reinforce_forward.1} parent=5 // pred_check
        _
      $region63: #{_reinforce_forward.1} parent=5 // pred_check_branch
        %188 = sbr.rel (%p185) target = $region65
      $region64: #{_reinforce_forward.1} parent=5 // pred_region
        %s189 = ssub.s32 %s8, 1
        %s190 = sand.u32 %s61, 1
        %s191 = sand.u32 %s61, 1
        %s192 = smul.addr %s191, 8
        %s193 = scalar_lea.vmem [#allocation3], %s192
        // Predicated region
        $region66: #{_reinforce_forward.1} parent=64 // pred_check
          %p194 = pneg %p74
        $region67: #{_reinforce_forward.1} parent=64 // pred_check_branch
          %196 = sbr.rel (%p194) target = $region69
        $region68: #{_reinforce_forward.1} parent=64 // pred_region
          _
        $region69: #{_reinforce_forward.1} parent=64 // pred_fallthru
          _
        %s197 = smul.u32 2, %s17
        %p198 = scmp.lt.s32.totalorder %s197, 3
        %s199 = scalar_select %p198, %s197, 3
        %s200 = smul.addr %s199, 8
        %s201 = scalar_lea.vmem %s0, %s200
        %p202 = pneg %p46
        %p203 = pneg %p43
        %s204 = sand.u32 %s61, 1
        %s205 = sand.u32 %s61, 1
        %s206 = smul.addr %s205, 8
        %s207 = scalar_lea.vmem [#allocation3], %s206
        %p208 = pneg %p74
        %p209 = pneg %p71
        %p210 = pneg %p100
        %p211 = pneg %p97
        %s212 = smul.u32 2, %s17
        %p213 = scmp.lt.s32.totalorder %s212, 3
        %s214 = scalar_select %p213, %s212, 3
        %s215 = smul.addr %s214, 8
        %s216 = scalar_lea.vmem %s2, %s215
        %s217 = smul.u32 2, %s17
        %p218 = scmp.lt.s32.totalorder %s217, 3
        %s219 = scalar_select %p218, %s217, 3
        %s220 = smul.addr %s219, 8
        %s221 = scalar_lea.vmem %s0, %s220
        %s222 = smul.u32 2, %s17
        %s223 = smul.u32 2, %s17
        %s224 = smul.u32 2, %s17
        %p225 = scmp.lt.s32.totalorder %s224, 3
        %s226 = scalar_select %p225, %s224, 3
        %s227 = smul.addr %s226, 8
        %s228 = scalar_lea.vmem %s2, %s227
        %s229 = smul.u32 2, %s17
        %p230 = scmp.eq.s32.totalorder %s18, 0
        // Predicated region
        $region70: #{_reinforce_forward.1} parent=64 // pred_check
          %p231 = pneg %p230
        $region71: #{_reinforce_forward.1} parent=64 // pred_check_branch
          %233 = sbr.rel (%p231) target = $region73
        $region72: #{_reinforce_forward.1} parent=64 // pred_region
          %234 = vst [vmem:[#allocation2] sm:$0xff] 0.0
          %235 = vst [vmem:[#allocation2 + $0x8] sm:$0xff] 0.0
        $region73: #{_reinforce_forward.1} parent=64 // pred_fallthru
          _
        %v236 = vld [vmem:[%s193] sm:$0xf]
        %v237 = vld [vmem:[%s193 + $0x4] sm:$0xf]
        %v238 = vunpack.c.l.bf16 %v236
        %v239 = vunpack.c.l.bf16 %v237
        %v240 = vld [vmem:[#allocation2] sm:$0xff]
        %v241 = vld [vmem:[#allocation2 + $0x8] sm:$0xff]
        %v242 = vadd.f32 %v240, %v238
        %v243 = vadd.f32 %v241, %v239
        %244 = vst [vmem:[#allocation2] sm:$0xff] %v242
        %245 = vst [vmem:[#allocation2 + $0x8] sm:$0xff] %v243
        %p246 = scmp.eq.s32.totalorder %s18, 3
        // Predicated region
        $region74: #{_reinforce_forward.1} parent=64 // pred_check
          %p247 = pneg %p246
        $region75: #{_reinforce_forward.1} parent=64 // pred_check_branch
          %249 = sbr.rel (%p247) target = $region77
        $region76: #{_reinforce_forward.1} parent=64 // pred_region
          %v250 = vld [vmem:[#allocation2] sm:$0xff]
          %v251 = vld [vmem:[#allocation2 + $0x8] sm:$0xff]
          %252 = vadd.xlane.f32.xlu0 %v250
          %v253 = vpop.xlane.xlu0 %252
          %254 = vadd.xlane.f32.xlu0 %v251
          %v255 = vpop.xlane.xlu0 %254
          %v256 = vld [vmem:[%s221] sm:$0xff]
          %v257 = vld [vmem:[%s221 + $0x8] sm:$0xff]
          %v258 = vmul.f32 %v253, 0.001953125
          %v259 = vmul.f32 %v255, 0.001953125
          %v260 = vmul.f32 %v256, %v258
          %v261 = vmul.f32 %v257, %v259
          %vm262 = vcmask 7168
          %263 = vst.msk [vmem:[%s228] sm:$0xff] %vm262, %v260
          %264 = vst.msk [vmem:[%s228 + $0x8] sm:$0xff] %vm262, %v261
        $region77: #{_reinforce_forward.1} parent=64 // pred_fallthru
          _
        %s265 = smul.u32 2, %s17
        %p266 = scmp.lt.s32.totalorder %s265, 3
        %s267 = scalar_select %p266, %s265, 3
        %s268 = smul.addr %s267, 8
        %s269 = scalar_lea.vmem %s2, %s268
        // Predicated region
        $region78: #{_reinforce_forward.1} parent=64 // pred_check
          %p270 = pneg %p97
        $region79: #{_reinforce_forward.1} parent=64 // pred_check_branch
          %272 = sbr.rel (%p270) target = $region81
        $region80: #{_reinforce_forward.1} parent=64 // pred_region
          %s273 = smul.u32 2, %s17
        $region81: #{_reinforce_forward.1} parent=64 // pred_fallthru
          _
      $region65: #{_reinforce_forward.1} parent=5 // pred_fallthru
        _
      %p274 = scmp.le.s32.totalorder 2, %s8
      // Predicated region
      $region82: #{_reinforce_forward.1} parent=5 // pred_check
        %p275 = pneg %p274
      $region83: #{_reinforce_forward.1} parent=5 // pred_check_branch
        %277 = sbr.rel (%p275) target = $region85
      $region84: #{_reinforce_forward.1} parent=5 // pred_region
        %s278 = ssub.s32 %s8, 2
        // Predicated region
        $region86: #{_reinforce_forward.1} parent=84 // pred_check
          %p279 = pneg %p103
        $region87: #{_reinforce_forward.1} parent=84 // pred_check_branch
          %281 = sbr.rel (%p279) target = $region89
        $region88: #{_reinforce_forward.1} parent=84 // pred_region
          %s282 = smul.u32 2, %s19
          %p283 = scmp.lt.s32.totalorder %s282, 3
          %s284 = scalar_select %p283, %s282, 3
          %s285 = smul.addr %s284, 8
          %s286 = scalar_lea.vmem %s2, %s285
        $region89: #{_reinforce_forward.1} parent=84 // pred_fallthru
          _
      $region85: #{_reinforce_forward.1} parent=5 // pred_fallthru
        _
    $region6: #{_reinforce_forward.1} parent=1 // loop_footer
      %s12 = sadd.s32 1, %s8
    $region7: #{_reinforce_forward.1} parent=1 // loop_footer_branch
      %7 = sbr.rel target = $region3
    $region8: #{_reinforce_forward.1} parent=1 // loop_exit
      _

</llo_original>
